<compile_context>
chip_gen: v7x
topology: tpu7x:2x2x1
jax: 0.10.0
libtpu: 0.0.40
codegen_flags: <defaults>
</compile_context>

<pallas_src>
import math
import functools

import jax
import jax.numpy as jnp
from jax import lax
from jax.experimental import pallas as pl
from jax.experimental.pallas import tpu as pltpu


def _round_up(a: int, b: int) -> int:
    return ((a + b - 1) // b) * b


def _vmem_budget_bytes() -> int:
    """~55% of physical VMEM per core (v7x: 64 MiB -> ~35 MiB; v5e/v6e: 128 MiB -> ~70 MiB)."""
    cap = 64 * 1024 * 1024
    try:
        info = pltpu.get_tpu_info()
        c = getattr(info, "vmem_capacity_bytes", None)
        if c:
            cap = int(c)
    except Exception:
        pass
    return int(0.55 * cap)


_VMEM_BUDGET = _vmem_budget_bytes()
_VMEM_LIMIT = max(32 * 1024 * 1024, _VMEM_BUDGET)

# Contraction dims: (tm, tk) . (tn, tk) -> (tm, tn), i.e. x @ w.T per tile,
# with W kept in its native (N, K) layout (K lane-dense on the RHS).
_DOT_DIMS = (((1,), (1,)), ((), ()))


def _linear_kernel_acc(x_ref, w_ref, o_ref, acc_ref):
    """K-tiled path: f32 accumulator resident across the (innermost) K grid axis."""
    k = pl.program_id(2)

    @pl.when(k == 0)
    def _():
        acc_ref[...] = jnp.zeros_like(acc_ref)

    acc_ref[...] += lax.dot_general(
        x_ref[...], w_ref[...], _DOT_DIMS, preferred_element_type=jnp.float32
    )

    @pl.when(k == pl.num_programs(2) - 1)
    def _():
        o_ref[...] = acc_ref[...].astype(o_ref.dtype)


def _linear_kernel_single_k(x_ref, w_ref, o_ref):
    """Single-K-tile path: no accumulator scratch, write the MXU result directly."""
    o_ref[...] = lax.dot_general(
        x_ref[...], w_ref[...], _DOT_DIMS, preferred_element_type=jnp.float32
    ).astype(o_ref.dtype)


def _select_tiles(M, N, K, x_isize, w_isize, o_isize, tm, tn, tk):
    """Pick MXU-friendly tiles capped to the problem and to the VMEM budget."""
    sub = {4: 8, 2: 16, 1: 32}.get(x_isize, 8)

    if tm is None:
        tm = 512
    if tn is None:
        tn = 1024
    if tk is None:
        tk = 1024 if K >= 2048 else 512

    # Align and cap to the (padded) problem size.
    tm = _round_up(max(sub, min(tm, _round_up(M, sub))), sub)
    tn = _round_up(max(128, min(tn, _round_up(N, 128))), 128)
    tk = _round_up(max(128, min(tk, _round_up(K, 128))), 128)

    def footprint(_tm, _tn, _tk):
        # double-buffered x + w + out tiles, plus one f32 accumulator tile
        return (2 * _tm * _tk * x_isize
                + 2 * _tn * _tk * w_isize
                + 2 * _tm * _tn * o_isize
                + _tm * _tn * 4)

    # Shrink the largest tile dim until the footprint fits the VMEM budget.
    while footprint(tm, tn, tk) > _VMEM_BUDGET:
        if tn >= tm and tn >= tk and tn > 128:
            tn = _round_up(max(tn // 2, 128), 128)
        elif tm >= tk and tm > sub:
            tm = _round_up(max(tm // 2, sub), sub)
        elif tk > 128:
            tk = _round_up(max(tk // 2, 128), 128)
        else:
            break

    # Megacore (v7x has 2 TensorCores): keep at least one parallel grid axis >= 2
    # by preferring to split N rather than collapsing everything into one tile.
    Mp = _round_up(M, tm)
    Np0 = _round_up(N, 128)
    if Mp // tm == 1 and _round_up(N, tn) // tn == 1 and Np0 >= 256:
        tn = _round_up(max(Np0 // 2, 128), 128)

    return tm, tn, tk


@functools.partial(jax.jit, static_argnames=("tm", "tn", "tk"))
def _linear_2d(x, w, *, tm, tn, tk):
    M, K = x.shape
    N, _ = w.shape
    out_dtype = jnp.result_type(x.dtype, w.dtype)

    Mp, Kp, Np = _round_up(M, tm), _round_up(K, tk), _round_up(N, tn)

    # Zero-padding is harmless for the contraction; done inside jit so XLA can
    # fuse it with the surrounding graph rather than emit a standalone copy.
    x_p = x if (Mp, Kp) == (M, K) else jnp.pad(x, ((0, Mp - M), (0, Kp - K)))
    w_p = w if (Np, Kp) == (N, K) else jnp.pad(w, ((0, Np - N), (0, Kp - K)))

    nk = Kp // tk
    if nk == 1:
        grid = (Mp // tm, Np // tn)
        grid_spec = pltpu.PrefetchScalarGridSpec(
            num_scalar_prefetch=0,
            grid=grid,
            in_specs=[
                pl.BlockSpec((tm, tk), lambda i, j: (i, 0)),
                pl.BlockSpec((tn, tk), lambda i, j: (j, 0)),
            ],
            out_specs=pl.BlockSpec((tm, tn), lambda i, j: (i, j)),
        )
        kernel = _linear_kernel_single_k
        dim_sem = ("parallel", "parallel")
    else:
        grid = (Mp // tm, Np // tn, nk)
        grid_spec = pltpu.PrefetchScalarGridSpec(
            num_scalar_prefetch=0,
            grid=grid,
            in_specs=[
                pl.BlockSpec((tm, tk), lambda i, j, k: (i, k)),
                pl.BlockSpec((tn, tk), lambda i, j, k: (j, k)),
            ],
            out_specs=pl.BlockSpec((tm, tn), lambda i, j, k: (i, j)),
            scratch_shapes=[pltpu.VMEM((tm, tn), jnp.float32)],
        )
        kernel = _linear_kernel_acc
        dim_sem = ("parallel", "parallel", "arbitrary")

    # NOTE: for the pure weight-streaming regime (Mp//tm == 1) a deeper weight
    # buffer (pipeline_mode=pl.Buffered(3)) can hide K-boundary DMA bubbles;
    # left at the default depth here for portability.
    out_p = pl.pallas_call(
        kernel,
        out_shape=jax.ShapeDtypeStruct((Mp, Np), out_dtype),
        grid_spec=grid_spec,
        compiler_params=pltpu.CompilerParams(
            dimension_semantics=dim_sem,
            vmem_limit_bytes=_VMEM_LIMIT,
        ),
    )(x_p, w_p)

    if (Mp, Np) != (M, N):
        out_p = out_p[:M, :N]
    return out_p


def linear_forward(x, w, *, tm=None, tn=None, tk=None):
    """y = einsum('...i,oi->...o', x, w) via a Pallas TPU kernel.

    x: (..., in_features)
    w: (out_features, in_features)   (PyTorch layout, used as-is; no transpose)
    returns: (..., out_features)
    """
    lead = x.shape[:-1]
    K = x.shape[-1]
    N, K2 = w.shape
    assert K == K2, "in_features mismatch"

    M = int(math.prod(lead)) if lead else 1
    x2 = jnp.reshape(x, (M, K))

    x_isize = jnp.dtype(x.dtype).itemsize
    w_isize = jnp.dtype(w.dtype).itemsize
    o_isize = jnp.dtype(jnp.result_type(x.dtype, w.dtype)).itemsize
    tm, tn, tk = _select_tiles(M, N, K, x_isize, w_isize, o_isize, tm, tn, tk)

    y2 = _linear_2d(x2, w, tm=tm, tn=tn, tk=tk)
    return jnp.reshape(y2, (*lead, N))


def init_linear_weight(key, in_features, out_features, dtype=jnp.float32):
    """Matches nn.init.trunc_normal_(W, mean=0, std=std, a=-3*std, b=3*std)."""
    std = math.sqrt(2.0 / (in_features + out_features))
    w = jax.random.truncated_normal(
        key, lower=-3.0, upper=3.0, shape=(out_features, in_features)
    ) * std
    return w.astype(dtype)


if __name__ == "__main__":
    key = jax.random.PRNGKey(0)
    kx, kw = jax.random.split(key)

    # 1) Basic small Linear: (batch=8, in=32) @ W(out=128, in=32)
    batch, in_features, out_features = 8, 32, 128
    x = jax.random.normal(kx, (batch, in_features), dtype=jnp.float32)
    W = init_linear_weight(kw, in_features, out_features, dtype=jnp.float32)
    y = jax.block_until_ready(linear_forward(x, W))
    y_ref = jnp.einsum("bi,oi->bo", x, W)
    assert y.shape == (batch, out_features)
    assert jnp.allclose(y, y_ref, atol=1e-5, rtol=1e-5)

    # 2) N-D batch ('...i,oi->...o') with ragged K/N (exercises padding).
    x3 = jax.random.normal(kx, (2, 5, 96), dtype=jnp.float32)
    W3 = init_linear_weight(kw, 96, 130, dtype=jnp.float32)
    y3 = jax.block_until_ready(linear_forward(x3, W3))
    y3_ref = jnp.einsum("...i,oi->...o", x3, W3)
    assert y3.shape == (2, 5, 130)
    assert jnp.allclose(y3, y3_ref, atol=1e-4, rtol=1e-4)

    # 3) Multi-K-tile path (f32 accumulator across the K grid axis).
    xk = jax.random.normal(kx, (64, 300), dtype=jnp.float32)
    Wk = init_linear_weight(kw, 300, 130, dtype=jnp.float32)
    yk = jax.block_until_ready(linear_forward(xk, Wk, tk=128))
    yk_ref = jnp.einsum("bi,oi->bo", xk, Wk)
    assert yk.shape == (64, 130)
    assert jnp.allclose(yk, yk_ref, atol=1e-4, rtol=1e-4)

    # 4) bf16 fast path (half the HBM bytes; f32 accumulation inside).
    xb = jax.random.normal(kx, (16, 256), dtype=jnp.float32)
    Wb = init_linear_weight(kw, 256, 384, dtype=jnp.float32)
    yb = jax.block_until_ready(
        linear_forward(xb.astype(jnp.bfloat16), Wb.astype(jnp.bfloat16))
    )
    yb_ref = jnp.einsum("bi,oi->bo", xb, Wb)
    assert yb.shape == (16, 384)
    assert jnp.allclose(yb.astype(jnp.float32), yb_ref, atol=5e-2, rtol=5e-2)

    print("KERNEL_OK")
</pallas_src>

<mosaic_0001>
module attributes {stable_mosaic.version = 11 : i64} {
  func.func @_linear_kernel_single_k(%arg0: i32, %arg1: i32, %arg2: memref<8x128xf32, #tpu.memory_space<vmem>>, %arg3: memref<128x128xf32, #tpu.memory_space<vmem>>, %arg4: memref<8x128xf32, #tpu.memory_space<vmem>>) attributes {dimension_semantics = [#tpu.dimension_semantics<parallel>, #tpu.dimension_semantics<parallel>], iteration_bounds = array<i64: 1, 1>, scalar_prefetch = 0 : i64, scratch_operands = 0 : i64, tpu.core_type = #tpu.core_type<tc>, window_params = [{transform_indices = @transform_0, window_bounds = array<i64: 8, 128>}, {transform_indices = @transform_1, window_bounds = array<i64: 128, 128>}, {transform_indices = @transform_2, window_bounds = array<i64: 8, 128>}]} {
    %c0 = arith.constant 0 : index
    %c0_0 = arith.constant 0 : index
    %0 = vector.load %arg2[%c0, %c0_0] : memref<8x128xf32, #tpu.memory_space<vmem>>, vector<8x128xf32>
    %c0_1 = arith.constant 0 : index
    %c0_2 = arith.constant 0 : index
    %1 = vector.load %arg3[%c0_1, %c0_2] : memref<128x128xf32, #tpu.memory_space<vmem>>, vector<128x128xf32>
    %cst = arith.constant dense<0.000000e+00> : vector<8x128xf32>
    %2 = tpu.matmul %0, %1, %cst {dimension_numbers = #tpu.dot_dimension_numbers<[1], [1], [0], [0], [0, 0, 1, 0], [], []>} : vector<8x128xf32>, vector<128x128xf32>, vector<8x128xf32> -> vector<8x128xf32>
    %c0_3 = arith.constant 0 : index
    %c0_4 = arith.constant 0 : index
    %3 = vector.load %arg4[%c0_3, %c0_4] : memref<8x128xf32, #tpu.memory_space<vmem>>, vector<8x128xf32>
    tpu.vector_store %arg4[%c0_3, %c0_4], %2 {strides = array<i32>} : memref<8x128xf32, #tpu.memory_space<vmem>>, vector<8x128xf32>,
    return
  }
  func.func @transform_0(%arg0: i32, %arg1: i32) -> (i32, i32) {
    %c0_i32 = arith.constant 0 : i32
    %c0_i32_0 = arith.constant 0 : i32
    return %arg0, %c0_i32 : i32, i32
  }
  func.func @transform_1(%arg0: i32, %arg1: i32) -> (i32, i32) {
    %c0_i32 = arith.constant 0 : i32
    %c0_i32_0 = arith.constant 0 : i32
    return %arg1, %c0_i32 : i32, i32
  }
  func.func @transform_2(%arg0: i32, %arg1: i32) -> (i32, i32) {
    %c0_i32 = arith.constant 0 : i32
    return %arg0, %arg1 : i32, i32
  }
}

</mosaic_0001>

<llo_original>
// kernel: _linear_2d.1
$region0: #{_linear_2d.1}
  #allocation0 [shape = 'u32[]', space=smem, size = 0x4, offset = 0x4, fixed_abs, tag = 'smem constant byte address 0x4 - core index']
  #allocation1 [shape = 'u32[144,128]{1,0:T(1,128)}', space=vmem, size = 0x12000, scoped, tag = 'internal scratch']
  %s0 = inlined_call_operand.vmem [shape: f32[8,128], index: 0, kind: input, shape index: {}]
  %s1 = inlined_call_operand.vmem [shape: f32[128,128], index: 1, kind: input, shape index: {}]
  %s2 = inlined_call_operand.hbm [shape: f32[8,128], index: 2, kind: output, shape index: {}]
  %s3 = sld [smem:[#allocation0]]
  $region18: #{_linear_2d.1} parent=0
    _
  %s5 = ssub.s32 1, %s3
  %s6 = scalar_select 0, %s5, %s3
  $region1: #{_linear_2d.1} parent=0
    #allocation2 [shape = 'u8[4096]{0}', space=vmem, size = 0x1000, scoped, tag = 'output window, operand 0, single buffered']
    #allocation3 [shape = 's32[1]{0}', space=sflag, size = 0x4, scoped, tag = 'scoped memory for _linear_2d.1']
    %7 = vsyncpa [#allocation3], 0
    // Predicated region
    $region2: #{_linear_2d.1} parent=1 // pred_check
      _
    $region3: #{_linear_2d.1} parent=1 // pred_check_branch
      %9 = sbr.rel (0) target = $region5
    $region4: #{_linear_2d.1} parent=1 // pred_region
      _
    $region5: #{_linear_2d.1} parent=1 // pred_fallthru
      _
    // Predicated region
    $region6: #{_linear_2d.1} parent=1 // pred_check
      _
    $region7: #{_linear_2d.1} parent=1 // pred_check_branch
      %11 = sbr.rel (0) target = $region9
    $region8: #{_linear_2d.1} parent=1 // pred_region
      _
    $region9: #{_linear_2d.1} parent=1 // pred_fallthru
      _
    %v12 = vld [vmem:[%s0] sm:$0xff]
    %v13 = vld [vmem:[%s1] sm:$0xff]
    %v14 = vld [vmem:[%s1 + $0x8] sm:$0xff]
    %v15 = vld [vmem:[%s1 + $0x10] sm:$0xff]
    %v16 = vld [vmem:[%s1 + $0x18] sm:$0xff]
    %v17 = vld [vmem:[%s1 + $0x20] sm:$0xff]
    %v18 = vld [vmem:[%s1 + $0x28] sm:$0xff]
    %v19 = vld [vmem:[%s1 + $0x30] sm:$0xff]
    %v20 = vld [vmem:[%s1 + $0x38] sm:$0xff]
    %v21 = vld [vmem:[%s1 + $0x40] sm:$0xff]
    %v22 = vld [vmem:[%s1 + $0x48] sm:$0xff]
    %v23 = vld [vmem:[%s1 + $0x50] sm:$0xff]
    %v24 = vld [vmem:[%s1 + $0x58] sm:$0xff]
    %v25 = vld [vmem:[%s1 + $0x60] sm:$0xff]
    %v26 = vld [vmem:[%s1 + $0x68] sm:$0xff]
    %v27 = vld [vmem:[%s1 + $0x70] sm:$0xff]
    %v28 = vld [vmem:[%s1 + $0x78] sm:$0xff]
    %29 = vmatprep.subr.mxu0 0.0
    %30 = vmatpush1.xpose.msra.mxu0 %v13
    %31 = vmatprep.subr.mxu0 0.0
    %32 = vmatpush1.xpose.msra.mxu0 %v14
    %33 = vmatprep.subr.mxu0 0.0
    %34 = vmatpush1.xpose.msra.mxu0 %v15
    %35 = vmatprep.subr.mxu0 0.0
    %36 = vmatpush1.xpose.msra.mxu0 %v16
    %37 = vmatprep.subr.mxu0 0.0
    %38 = vmatpush1.xpose.msra.mxu0 %v17
    %39 = vmatprep.subr.mxu0 0.0
    %40 = vmatpush1.xpose.msra.mxu0 %v18
    %41 = vmatprep.subr.mxu0 0.0
    %42 = vmatpush1.xpose.msra.mxu0 %v19
    %43 = vmatprep.subr.mxu0 0.0
    %44 = vmatpush1.xpose.msra.mxu0 %v20
    %45 = vmatprep.subr.mxu0 0.0
    %46 = vmatpush1.xpose.msra.mxu0 %v21
    %47 = vmatprep.subr.mxu0 0.0
    %48 = vmatpush1.xpose.msra.mxu0 %v22
    %49 = vmatprep.subr.mxu0 0.0
    %50 = vmatpush1.xpose.msra.mxu0 %v23
    %51 = vmatprep.subr.mxu0 0.0
    %52 = vmatpush1.xpose.msra.mxu0 %v24
    %53 = vmatprep.subr.mxu0 0.0
    %54 = vmatpush1.xpose.msra.mxu0 %v25
    %55 = vmatprep.subr.mxu0 0.0
    %56 = vmatpush1.xpose.msra.mxu0 %v26
    %57 = vmatprep.subr.mxu0 0.0
    %58 = vmatpush1.xpose.msra.mxu0 %v27
    %59 = vmatprep.subr.mxu0 0.0
    %60 = vmatpush1.xpose.msra.mxu0 %v28
    %61 = vmatprep.subr.mxu0 0.0
    %62 = vmatpush1.xpose.msra.mxu0 0.0
    %63 = vmatprep.subr.mxu0 0.0
    %64 = vmatpush1.xpose.msra.mxu0 0.0
    %65 = vmatprep.subr.mxu0 0.0
    %66 = vmatpush1.xpose.msra.mxu0 0.0
    %67 = vmatprep.subr.mxu0 0.0
    %68 = vmatpush1.xpose.msra.mxu0 0.0
    %69 = vmatprep.subr.mxu0 0.0
    %70 = vmatpush1.xpose.msra.mxu0 0.0
    %71 = vmatprep.subr.mxu0 0.0
    %72 = vmatpush1.xpose.msra.mxu0 0.0
    %73 = vmatprep.subr.mxu0 0.0
    %74 = vmatpush1.xpose.msra.mxu0 0.0
    %75 = vmatprep.subr.mxu0 0.0
    %76 = vmatpush1.xpose.msra.mxu0 0.0
    %77 = vmatprep.subr.mxu0 0.0
    %78 = vmatpush1.xpose.msra.mxu0 0.0
    %79 = vmatprep.subr.mxu0 0.0
    %80 = vmatpush1.xpose.msra.mxu0 0.0
    %81 = vmatprep.subr.mxu0 0.0
    %82 = vmatpush1.xpose.msra.mxu0 0.0
    %83 = vmatprep.subr.mxu0 0.0
    %84 = vmatpush1.xpose.msra.mxu0 0.0
    %85 = vmatprep.subr.mxu0 0.0
    %86 = vmatpush1.xpose.msra.mxu0 0.0
    %87 = vmatprep.subr.mxu0 0.0
    %88 = vmatpush1.xpose.msra.mxu0 0.0
    %89 = vmatprep.subr.mxu0 0.0
    %90 = vmatpush1.xpose.msra.mxu0 0.0
    %91 = vmatprep.subr.mxu0 0.0
    %92 = vmatpush1.xpose.msra.mxu0 0.0
    %93 = vmatprep.mubr.f32.mxu0 0.0
    %94 = vmatmul.mubr.f32.gmra.mrb[0].mxu0 %v12
    %v95 = vpop.f32.mrb[0].mxu0
    %v96 = vadd.f32 0.0, %v95
    %v97 = vpop.f32.mrb[0].mxu0
    %98 = vdwg.mxu0
    %99 = vst [vmem:[#allocation2] sm:$0xff] %v96
    // Predicated region
    $region10: #{_linear_2d.1} parent=1 // pred_check
      _
    $region11: #{_linear_2d.1} parent=1 // pred_check_branch
      %101 = sbr.rel (0) target = $region13
    $region12: #{_linear_2d.1} parent=1 // pred_region
      %s103 = ssub.s32 128, 128
      %104 = vsyncadd [#allocation3], %s103
      %s106 = sshll.u32 [#allocation2], 4
      %s107 = int_to_ptr.vmem [resolvable:$true] %s106
      %109 = dma.vmem_to_hbm [thread:$0]  %s107, 128, %s2, [#allocation3]
    $region13: #{_linear_2d.1} parent=1 // pred_fallthru
      _
    // Predicated region
    $region14: #{_linear_2d.1} parent=1 // pred_check
      _
    $region15: #{_linear_2d.1} parent=1 // pred_check_branch
      %111 = sbr.rel (0) target = $region17
    $region16: #{_linear_2d.1} parent=1 // pred_region
      %112 = dma.done [#allocation3], 128
    $region17: #{_linear_2d.1} parent=1 // pred_fallthru
      _
    %113 = vsyncpa [#allocation3], 1

</llo_original>
